<compile_context>
chip_gen: v7x
topology: tpu7x:2x2x1
jax: 0.10.0
libtpu: 0.0.40
codegen_flags: <defaults>
</compile_context>

<pallas_src>
import jax
import jax.numpy as jnp
from jax.experimental import pallas as pl
from jax.experimental.pallas import tpu as pltpu

_LANE = 128


def _round_up(x, m):
    return ((x + m - 1) // m) * m


def moe_cls_kernel(x_ref, g_ref, wd_ref, bd_ref, wo_ref, bo_ref, out_ref, h_acc):
    """Grid = (batch_tiles, E); each e-step streams one expert's dense weights.

    x_ref  : (TB, D)     bf16  CLS activations          (resident across e)
    g_ref  : (TB, E)     f32   routing gates            (resident across e)
    wd_ref : (1, D, H)   bf16  dense W of expert e      (streamed, double-buffered)
    bd_ref : (E, H)      f32   dense biases             (grid-constant, tiny)
    wo_ref : (E, H, Cp)  bf16  out_proj W, C padded     (grid-constant, small)
    bo_ref : (E, Cp)     f32   out_proj biases, padded  (grid-constant, tiny)
    out_ref: (TB, Cp)    f32   logits                   (written at e == E-1)
    h_acc  : (TB, H)     f32   VMEM scratch accumulator for the dense layer
    """
    e = pl.program_id(1)
    last_e = pl.num_programs(1) - 1
    E = g_ref.shape[1]

    @pl.when(e == 0)
    def _():
        h_acc[...] = jnp.zeros_like(h_acc)

    g = g_ref[...]                                          # (TB, E) f32
    # Gate column of the currently streamed expert (dynamic e): mask + lane
    # reduce (XLU) instead of a dynamic lane slice.
    lane = jax.lax.broadcasted_iota(jnp.int32, g.shape, 1)
    ge = jnp.sum(jnp.where(lane == e, g, 0.0), axis=1, keepdims=True)   # (TB, 1)

    # Dense layer, expert e: bf16 MXU matmul with f32 accumulation; gate-mix
    # the *outputs* (linearity) so no per-example (H, D) mixed weight exists.
    he = jnp.dot(x_ref[...], wd_ref[0],
                 preferred_element_type=jnp.float32)        # (TB, H) f32
    h_acc[...] += ge * he                                   # f32 VPU mix

    @pl.when(e == last_e)
    def _():
        # Fold all gate-mixed dense biases in via one tiny matmul, then tanh (f32).
        h = jnp.tanh(h_acc[...] +
                     jnp.dot(g, bd_ref[...], preferred_element_type=jnp.float32))
        h_bf = h.astype(wo_ref.dtype)                       # bf16 for the MXU
        # out_proj: gate-mixed expert outputs; biases folded via (TB,E)@(E,Cp).
        out = jnp.dot(g, bo_ref[...], preferred_element_type=jnp.float32)  # (TB, Cp)
        for ee in range(E):                                 # E small & static -> unrolled
            oe = jnp.dot(h_bf, wo_ref[ee], preferred_element_type=jnp.float32)
            out = out + g[:, ee:ee + 1] * oe
        out_ref[...] = out.astype(out_ref.dtype)


def prepare_moe_classifier_params(wd, bd, wo, bo, *, compute_dtype=jnp.bfloat16):
    """One-time parameter prep, hoisted out of the forward path.

    wd/bd : (E, H, D) / (E, H)  stacked expert dense params
    wo/bo : (E, C, H) / (E, C)  stacked expert out_proj params
    Transposes to matmul-friendly layouts, casts matmul operands to bf16, and
    zero-pads the class dim to a multiple of 128 (lane-dense stores / tiles).
    """
    E, H, D = wd.shape
    C = wo.shape[1]
    Cp = _round_up(max(C, _LANE), _LANE)
    wd_t = jnp.transpose(wd, (0, 2, 1)).astype(compute_dtype)          # (E, D, H)
    wo_t = jnp.transpose(wo, (0, 2, 1)).astype(compute_dtype)          # (E, H, C)
    wo_t = jnp.pad(wo_t, ((0, 0), (0, 0), (0, Cp - C)))                # (E, H, Cp)
    bo_p = jnp.pad(bo.astype(jnp.float32), ((0, 0), (0, Cp - C)))      # (E, Cp)
    return dict(wd_t=wd_t, bd=bd.astype(jnp.float32), wo_t=wo_t, bo=bo_p,
                C=C, Cp=Cp, compute_dtype=compute_dtype)


def moe_classification_forward(X, gates, params, *, block_b=256):
    """MoE sparse-routing classification head (roberta branch).

    X      : (B, S, D) encoder output
    gates  : (B, E)    softmax routing weights (SharedState.sharedgates)
    params : output of prepare_moe_classifier_params (build once, reuse)
    returns (B, C) logits.
    """
    wd_t, bd, wo_t, bo = params["wd_t"], params["bd"], params["wo_t"], params["bo"]
    C, Cp = params["C"], params["Cp"]
    B, S, D = X.shape
    E, _, H = wd_t.shape

    # Only the CLS token feeds the classification head: slice it outside the
    # kernel so the full (B, S, D) sequence is never DMA'd.
    x_cls = X[:, 0, :].astype(params["compute_dtype"])      # (B, D) bf16
    gates = gates.astype(jnp.float32)                       # gate mix stays f32

    # Batch tile: largest tile that still yields >= 2 steps along the
    # "parallel" batch axis whenever B allows it (megacore on v7x).
    if B > block_b:
        TB = block_b
    else:
        TB = min(_round_up(B, 8), max(8, _round_up(pl.cdiv(B, 2), 8)))
    Bp = _round_up(B, TB)
    if Bp != B:
        pad = Bp - B
        x_cls = jnp.pad(x_cls, ((0, pad), (0, 0)))
        gates = jnp.pad(gates, ((0, pad), (0, 0)))          # zero gates -> zero rows

    grid = (Bp // TB, E)       # batch "parallel"; expert stream "arbitrary" (last)
    n_bt = Bp // TB

    # Generation-aware VMEM limit (~80% of capacity, capped at 100 MiB):
    # ~51 MiB on v7x (64 MiB/TC), ~100 MiB on v5e/v6e (128 MiB).
    try:
        vmem_cap = pltpu.get_tpu_info().vmem_capacity_bytes
    except Exception:
        vmem_cap = 64 * 1024 * 1024
    vmem_limit = int(min(100 * 1024 * 1024, int(vmem_cap * 0.8)))

    cost = pl.CostEstimate(
        flops=2 * Bp * E * (D * H + H * Cp) + 4 * Bp * E * (H + Cp),
        transcendentals=Bp * H,
        bytes_accessed=(x_cls.dtype.itemsize * Bp * D
                        + 4 * Bp * (E + Cp)
                        + n_bt * wd_t.dtype.itemsize * E * D * H
                        + wo_t.dtype.itemsize * E * H * Cp
                        + 4 * E * (H + Cp)),
    )

    out = pl.pallas_call(
        moe_cls_kernel,
        out_shape=jax.ShapeDtypeStruct((Bp, Cp), jnp.float32),
        grid=grid,
        in_specs=[
            pl.BlockSpec((TB, D), lambda i, e: (i, 0)),        # CLS acts (resident over e)
            pl.BlockSpec((TB, E), lambda i, e: (i, 0)),        # gates    (resident over e)
            pl.BlockSpec((1, D, H), lambda i, e: (e, 0, 0)),   # dense W, streamed per expert
            pl.BlockSpec((E, H), lambda i, e: (0, 0)),         # dense b    (grid-constant)
            pl.BlockSpec((E, H, Cp), lambda i, e: (0, 0, 0)),  # out_proj W (grid-constant)
            pl.BlockSpec((E, Cp), lambda i, e: (0, 0)),        # out_proj b (grid-constant)
        ],
        out_specs=pl.BlockSpec((TB, Cp), lambda i, e: (i, 0)),
        scratch_shapes=[pltpu.VMEM((TB, H), jnp.float32)],
        compiler_params=pltpu.CompilerParams(
            dimension_semantics=("parallel", "arbitrary"),
            vmem_limit_bytes=vmem_limit,
        ),
        cost_estimate=cost,
    )(x_cls, gates, wd_t, bd, wo_t, bo)

    return out[:B, :C]                                       # (B, C)


if __name__ == "__main__":
    # Small deterministic setup (B=6 also exercises the batch-padding path).
    B, S, D, H, C, E = 6, 8, 32, 32, 8, 4
    key = jax.random.PRNGKey(0)
    k_x, k_g, k_wd, k_bd, k_wo, k_bo = jax.random.split(key, 6)

    X = jax.random.normal(k_x, (B, S, D), jnp.float32)
    # SharedState.sharedgates: softmax routing weights produced by the encoder.
    gates = jax.nn.softmax(jax.random.normal(k_g, (B, E), jnp.float32), axis=-1)

    # Stacked expert classifier parameters (deterministic init).
    wd = 0.05 * jax.random.normal(k_wd, (E, H, D), jnp.float32)
    bd = 0.05 * jax.random.normal(k_bd, (E, H), jnp.float32)
    wo = 0.05 * jax.random.normal(k_wo, (E, C, H), jnp.float32)
    bo = 0.05 * jax.random.normal(k_bo, (E, C), jnp.float32)

    # One-time parameter prep (transpose + bf16 cast + class-dim pad), hoisted
    # out of the forward path.
    params = prepare_moe_classifier_params(wd, bd, wo, bo)

    out = jax.block_until_ready(moe_classification_forward(X, gates, params))

    # Plain-JAX f32 reference of the PyTorch semantics (mix weights, then apply).
    sel_wd = jnp.einsum('be,ehd->bhd', gates, wd)
    sel_bd = jnp.einsum('be,eh->bh', gates, bd)
    sel_wo = jnp.einsum('be,ech->bch', gates, wo)
    sel_bo = jnp.einsum('be,ec->bc', gates, bo)
    x_cls = X[:, 0, :]
    h_ref = jnp.tanh(jnp.einsum('bd,bhd->bh', x_cls, sel_wd) + sel_bd)
    ref = jnp.einsum('bh,bch->bc', h_ref, sel_wo) + sel_bo

    assert out.shape == (B, C), out.shape
    # bf16 matmul operands (f32 accumulation) -> tolerance loosened vs f32 ref.
    assert jnp.allclose(out, ref, atol=3e-2, rtol=3e-2), jnp.abs(out - ref).max()
    print("KERNEL_OK")
</pallas_src>

<mosaic_0001>
module attributes {stable_mosaic.version = 11 : i64} {
  func.func @moe_cls_kernel(%arg0: i32, %arg1: i32, %arg2: memref<8x32xbf16, #tpu.memory_space<vmem>>, %arg3: memref<8x4xf32, #tpu.memory_space<vmem>>, %arg4: memref<1x32x32xbf16, #tpu.memory_space<vmem>>, %arg5: memref<4x32xf32, #tpu.memory_space<vmem>>, %arg6: memref<4x32x128xbf16, #tpu.memory_space<vmem>>, %arg7: memref<4x128xf32, #tpu.memory_space<vmem>>, %arg8: memref<8x128xf32, #tpu.memory_space<vmem>>, %arg9: memref<8x32xf32, #tpu.memory_space<vmem>>) attributes {dimension_semantics = [#tpu.dimension_semantics<parallel>, #tpu.dimension_semantics<arbitrary>], iteration_bounds = array<i64: 1, 4>, scalar_prefetch = 0 : i64, scratch_operands = 1 : i64, tpu.core_type = #tpu.core_type<tc>, window_params = [{transform_indices = @transform_0, window_bounds = array<i64: 8, 32>}, {transform_indices = @transform_1, window_bounds = array<i64: 8, 4>}, {transform_indices = @transform_2, window_bounds = array<i64: 1, 32, 32>}, {pipeline_mode = #tpu.pipeline_mode<synchronous>, transform_indices = @transform_3, window_bounds = array<i64: 4, 32>}, {pipeline_mode = #tpu.pipeline_mode<synchronous>, transform_indices = @transform_4, window_bounds = array<i64: 4, 32, 128>}, {pipeline_mode = #tpu.pipeline_mode<synchronous>, transform_indices = @transform_5, window_bounds = array<i64: 4, 128>}, {transform_indices = @transform_6, window_bounds = array<i64: 8, 128>}]} {
    %c0_i32 = arith.constant 0 : i32
    %0 = arith.cmpi eq, %arg1, %c0_i32 : i32
    %1 = arith.extui %0 : i1 to i32
    %c0_i32_0 = arith.constant 0 : i32
    %2 = arith.cmpi ne, %1, %c0_i32_0 : i32
    scf.if %2 {
      %cst_14 = arith.constant 0.000000e+00 : f32
      %23 = vector.broadcast %cst_14 : f32 to vector<8x32xf32>
      %c0_15 = arith.constant 0 : index
      %c0_16 = arith.constant 0 : index
      %24 = vector.load %arg9[%c0_15, %c0_16] : memref<8x32xf32, #tpu.memory_space<vmem>>, vector<8x32xf32>
      tpu.vector_store %arg9[%c0_15, %c0_16], %23 {strides = array<i32>} : memref<8x32xf32, #tpu.memory_space<vmem>>, vector<8x32xf32>,
    } else {
    }
    %c0 = arith.constant 0 : index
    %c0_1 = arith.constant 0 : index
    %3 = vector.load %arg3[%c0, %c0_1] : memref<8x4xf32, #tpu.memory_space<vmem>>, vector<8x4xf32>
    %4 = tpu.iota {dimensions = array<i32: 1>} : vector<8x4xi32>
    %5 = vector.broadcast %arg1 : i32 to vector<8x4xi32>
    %6 = arith.cmpi eq, %4, %5 : vector<8x4xi32>
    %cst = arith.constant 0.000000e+00 : f32
    %7 = vector.broadcast %cst : f32 to vector<8x4xf32>
    %8 = arith.select %6, %3, %7 : vector<8x4xi1>, vector<8x4xf32>
    %cst_2 = arith.constant dense<0.000000e+00> : vector<8xf32>
    %9 = vector.multi_reduction <add>, %8, %cst_2 [1] : vector<8x4xf32> to vector<8xf32>
    %10 = vector.shape_cast %9 : vector<8xf32> to vector<8x1xf32>
    %c0_3 = arith.constant 0 : index
    %c0_4 = arith.constant 0 : index
    %11 = vector.load %arg2[%c0_3, %c0_4] : memref<8x32xbf16, #tpu.memory_space<vmem>>, vector<8x32xbf16>
    %c0_5 = arith.constant 0 : index
    %c0_6 = arith.constant 0 : index
    %c0_7 = arith.constant 0 : index
    %12 = vector.load %arg4[%c0_5, %c0_6, %c0_7] : memref<1x32x32xbf16, #tpu.memory_space<vmem>>, vector<1x32x32xbf16>
    %13 = vector.shape_cast %12 : vector<1x32x32xbf16> to vector<32x32xbf16>
    %cst_8 = arith.constant dense<0.000000e+00> : vector<8x32xf32>
    %14 = tpu.matmul %11, %13, %cst_8 {dimension_numbers = #tpu.dot_dimension_numbers<[1], [0], [0], [1], [0, 0, 1, 1], [], []>} : vector<8x32xbf16>, vector<32x32xbf16>, vector<8x32xf32> -> vector<8x32xf32>
    %c0_9 = arith.constant 0 : index
    %c0_10 = arith.constant 0 : index
    %15 = vector.load %arg9[%c0_9, %c0_10] : memref<8x32xf32, #tpu.memory_space<vmem>>, vector<8x32xf32>
    %16 = vector.broadcast %10 : vector<8x1xf32> to vector<8x32xf32>
    %17 = arith.mulf %16, %14 : vector<8x32xf32>
    %18 = arith.addf %15, %17 : vector<8x32xf32>
    %c0_11 = arith.constant 0 : index
    %c0_12 = arith.constant 0 : index
    %19 = vector.load %arg9[%c0_11, %c0_12] : memref<8x32xf32, #tpu.memory_space<vmem>>, vector<8x32xf32>
    tpu.vector_store %arg9[%c0_11, %c0_12], %18 {strides = array<i32>} : memref<8x32xf32, #tpu.memory_space<vmem>>, vector<8x32xf32>,
    %c3_i32 = arith.constant 3 : i32
    %20 = arith.cmpi eq, %arg1, %c3_i32 : i32
    %21 = arith.extui %20 : i1 to i32
    %c0_i32_13 = arith.constant 0 : i32
    %22 = arith.cmpi ne, %21, %c0_i32_13 : i32
    scf.if %22 {
      %c0_14 = arith.constant 0 : index
      %c0_15 = arith.constant 0 : index
      %23 = vector.load %arg9[%c0_14, %c0_15] : memref<8x32xf32, #tpu.memory_space<vmem>>, vector<8x32xf32>
      %c0_16 = arith.constant 0 : index
      %c0_17 = arith.constant 0 : index
      %24 = vector.load %arg5[%c0_16, %c0_17] : memref<4x32xf32, #tpu.memory_space<vmem>>, vector<4x32xf32>
      %cst_18 = arith.constant dense<0.000000e+00> : vector<8x32xf32>
      %25 = tpu.matmul %3, %24, %cst_18 {dimension_numbers = #tpu.dot_dimension_numbers<[1], [0], [0], [1], [0, 0, 1, 1], [], []>} : vector<8x4xf32>, vector<4x32xf32>, vector<8x32xf32> -> vector<8x32xf32>
      %26 = arith.addf %23, %25 : vector<8x32xf32>
      %27 = math.tanh %26 : vector<8x32xf32>
      %28 = arith.truncf %27 : vector<8x32xf32> to vector<8x32xbf16>
      %c0_19 = arith.constant 0 : index
      %c0_20 = arith.constant 0 : index
      %29 = vector.load %arg7[%c0_19, %c0_20] : memref<4x128xf32, #tpu.memory_space<vmem>>, vector<4x128xf32>
      %cst_21 = arith.constant dense<0.000000e+00> : vector<8x128xf32>
      %30 = tpu.matmul %3, %29, %cst_21 {dimension_numbers = #tpu.dot_dimension_numbers<[1], [0], [0], [1], [0, 0, 1, 1], [], []>} : vector<8x4xf32>, vector<4x128xf32>, vector<8x128xf32> -> vector<8x128xf32>
      %c0_22 = arith.constant 0 : index
      %c0_23 = arith.constant 0 : index
      %c0_24 = arith.constant 0 : index
      %31 = vector.load %arg6[%c0_22, %c0_23, %c0_24] : memref<4x32x128xbf16, #tpu.memory_space<vmem>>, vector<1x32x128xbf16>
      %32 = vector.shape_cast %31 : vector<1x32x128xbf16> to vector<32x128xbf16>
      %cst_25 = arith.constant dense<0.000000e+00> : vector<8x128xf32>
      %33 = tpu.matmul %28, %32, %cst_25 {dimension_numbers = #tpu.dot_dimension_numbers<[1], [0], [0], [1], [0, 0, 1, 1], [], []>} : vector<8x32xbf16>, vector<32x128xbf16>, vector<8x128xf32> -> vector<8x128xf32>
      %34 = vector.extract_strided_slice %3 {offsets = [0, 0], sizes = [8, 1], strides = [1, 1]} : vector<8x4xf32> to vector<8x1xf32>
      %35 = vector.broadcast %34 : vector<8x1xf32> to vector<8x128xf32>
      %36 = arith.mulf %35, %33 : vector<8x128xf32>
      %37 = arith.addf %30, %36 : vector<8x128xf32>
      %c1 = arith.constant 1 : index
      %c0_26 = arith.constant 0 : index
      %c0_27 = arith.constant 0 : index
      %38 = vector.load %arg6[%c1, %c0_26, %c0_27] : memref<4x32x128xbf16, #tpu.memory_space<vmem>>, vector<1x32x128xbf16>
      %39 = vector.shape_cast %38 : vector<1x32x128xbf16> to vector<32x128xbf16>
      %cst_28 = arith.constant dense<0.000000e+00> : vector<8x128xf32>
      %40 = tpu.matmul %28, %39, %cst_28 {dimension_numbers = #tpu.dot_dimension_numbers<[1], [0], [0], [1], [0, 0, 1, 1], [], []>} : vector<8x32xbf16>, vector<32x128xbf16>, vector<8x128xf32> -> vector<8x128xf32>
      %41 = vector.extract_strided_slice %3 {offsets = [0, 1], sizes = [8, 1], strides = [1, 1]} : vector<8x4xf32> to vector<8x1xf32>
      %42 = vector.broadcast %41 : vector<8x1xf32> to vector<8x128xf32>
      %43 = arith.mulf %42, %40 : vector<8x128xf32>
      %44 = arith.addf %37, %43 : vector<8x128xf32>
      %c2 = arith.constant 2 : index
      %c0_29 = arith.constant 0 : index
      %c0_30 = arith.constant 0 : index
      %45 = vector.load %arg6[%c2, %c0_29, %c0_30] : memref<4x32x128xbf16, #tpu.memory_space<vmem>>, vector<1x32x128xbf16>
      %46 = vector.shape_cast %45 : vector<1x32x128xbf16> to vector<32x128xbf16>
      %cst_31 = arith.constant dense<0.000000e+00> : vector<8x128xf32>
      %47 = tpu.matmul %28, %46, %cst_31 {dimension_numbers = #tpu.dot_dimension_numbers<[1], [0], [0], [1], [0, 0, 1, 1], [], []>} : vector<8x32xbf16>, vector<32x128xbf16>, vector<8x128xf32> -> vector<8x128xf32>
      %48 = vector.extract_strided_slice %3 {offsets = [0, 2], sizes = [8, 1], strides = [1, 1]} : vector<8x4xf32> to vector<8x1xf32>
      %49 = vector.broadcast %48 : vector<8x1xf32> to vector<8x128xf32>
      %50 = arith.mulf %49, %47 : vector<8x128xf32>
      %51 = arith.addf %44, %50 : vector<8x128xf32>
      %c3 = arith.constant 3 : index
      %c0_32 = arith.constant 0 : index
      %c0_33 = arith.constant 0 : index
      %52 = vector.load %arg6[%c3, %c0_32, %c0_33] : memref<4x32x128xbf16, #tpu.memory_space<vmem>>, vector<1x32x128xbf16>
      %53 = vector.shape_cast %52 : vector<1x32x128xbf16> to vector<32x128xbf16>
      %cst_34 = arith.constant dense<0.000000e+00> : vector<8x128xf32>
      %54 = tpu.matmul %28, %53, %cst_34 {dimension_numbers = #tpu.dot_dimension_numbers<[1], [0], [0], [1], [0, 0, 1, 1], [], []>} : vector<8x32xbf16>, vector<32x128xbf16>, vector<8x128xf32> -> vector<8x128xf32>
      %55 = vector.extract_strided_slice %3 {offsets = [0, 3], sizes = [8, 1], strides = [1, 1]} : vector<8x4xf32> to vector<8x1xf32>
      %56 = vector.broadcast %55 : vector<8x1xf32> to vector<8x128xf32>
      %57 = arith.mulf %56, %54 : vector<8x128xf32>
      %58 = arith.addf %51, %57 : vector<8x128xf32>
      %c0_35 = arith.constant 0 : index
      %c0_36 = arith.constant 0 : index
      %59 = vector.load %arg8[%c0_35, %c0_36] : memref<8x128xf32, #tpu.memory_space<vmem>>, vector<8x128xf32>
      tpu.vector_store %arg8[%c0_35, %c0_36], %58 {strides = array<i32>} : memref<8x128xf32, #tpu.memory_space<vmem>>, vector<8x128xf32>,
    } else {
    }
    return
  }
  func.func @transform_0(%arg0: i32, %arg1: i32) -> (i32, i32) {
    %c0_i32 = arith.constant 0 : i32
    %c0_i32_0 = arith.constant 0 : i32
    return %arg0, %c0_i32 : i32, i32
  }
  func.func @transform_1(%arg0: i32, %arg1: i32) -> (i32, i32) {
    %c0_i32 = arith.constant 0 : i32
    %c0_i32_0 = arith.constant 0 : i32
    return %arg0, %c0_i32 : i32, i32
  }
  func.func @transform_2(%arg0: i32, %arg1: i32) -> (i32, i32, i32) {
    %c0_i32 = arith.constant 0 : i32
    %c0_i32_0 = arith.constant 0 : i32
    %c0_i32_1 = arith.constant 0 : i32
    return %arg1, %c0_i32, %c0_i32_0 : i32, i32, i32
  }
  func.func @transform_3(%arg0: i32, %arg1: i32) -> (i32, i32) {
    %c0_i32 = arith.constant 0 : i32
    %c0_i32_0 = arith.constant 0 : i32
    %c0_i32_1 = arith.constant 0 : i32
    return %c0_i32, %c0_i32_0 : i32, i32
  }
  func.func @transform_4(%arg0: i32, %arg1: i32) -> (i32, i32, i32) {
    %c0_i32 = arith.constant 0 : i32
    %c0_i32_0 = arith.constant 0 : i32
    %c0_i32_1 = arith.constant 0 : i32
    %c0_i32_2 = arith.constant 0 : i32
    return %c0_i32, %c0_i32_0, %c0_i32_1 : i32, i32, i32
  }
  func.func @transform_5(%arg0: i32, %arg1: i32) -> (i32, i32) {
    %c0_i32 = arith.constant 0 : i32
    %c0_i32_0 = arith.constant 0 : i32
    %c0_i32_1 = arith.constant 0 : i32
    return %c0_i32, %c0_i32_0 : i32, i32
  }
  func.func @transform_6(%arg0: i32, %arg1: i32) -> (i32, i32) {
    %c0_i32 = arith.constant 0 : i32
    %c0_i32_0 = arith.constant 0 : i32
    return %arg0, %c0_i32 : i32, i32
  }
}

</mosaic_0001>

<llo_original>
// kernel: tpu_custom_call.1
$region0: #{tpu_custom_call.1}
  #allocation0 [shape = 'u32[]', space=smem, size = 0x4, offset = 0x4, fixed_abs, tag = 'smem constant byte address 0x4 - core index']
  #allocation1 [shape = 'u32[144,128]{1,0:T(1,128)}', space=vmem, size = 0x12000, scoped, tag = 'internal scratch']
  #allocation2 [shape = 'f32[8,32]{1,0:T(8,128)}', space=vmem, size = 0x1000, scoped, tag = 'scratch operand']
  %s0 = inlined_call_operand.vmem [shape: bf16[8,32], index: 0, kind: input, shape index: {}]
  %s1 = inlined_call_operand.vmem [shape: f32[8,4], index: 1, kind: input, shape index: {}]
  %s2 = inlined_call_operand.hbm [shape: bf16[4,32,32], index: 2, kind: input, shape index: {}]
  %s3 = inlined_call_operand.vmem [shape: f32[4,32], index: 3, kind: input, shape index: {}]
  %s4 = inlined_call_operand.hbm [shape: bf16[4,32,128], index: 4, kind: input, shape index: {}]
  %s5 = inlined_call_operand.vmem [shape: f32[4,128], index: 5, kind: input, shape index: {}]
  %s6 = inlined_call_operand.hbm [shape: f32[8,128], index: 6, kind: output, shape index: {}]
  %s7 = sld [smem:[#allocation0]]
  $region73: #{tpu_custom_call.1} parent=0
    _
  %s9 = ssub.s32 1, %s7
  %s10 = scalar_select 0, %s9, %s7
  $region1: #{tpu_custom_call.1} parent=0
    #allocation3 [shape = 'u8[16384]{0}', space=vmem, size = 0x4000, scoped, tag = 'input window, operand 2']
    #allocation4 [shape = 's32[2]{0}', space=sflag, size = 0x8, scoped, tag = 'scoped memory for tpu_custom_call.1']
    #allocation5 [shape = 's32[2]{0}', space=sflag, size = 0x8, scoped, tag = 'scoped memory for tpu_custom_call.1']
    #allocation6 [shape = 'u8[32768]{0}', space=vmem, size = 0x8000, scoped, tag = 'input window, operand 4, single buffered']
    #allocation7 [shape = 's32[1]{0}', space=sflag, size = 0x4, scoped, tag = 'scoped memory for tpu_custom_call.1']
    #allocation8 [shape = 'u8[4096]{0}', space=vmem, size = 0x1000, scoped, tag = 'output window, operand 0, single buffered']
    %11 = vsyncpa [#allocation4], 0
    %s12 = scalar_lea.sflag [#allocation4], 1
    %13 = vsyncpa %s12, 0
    %14 = vsyncpa [#allocation7], 0
    %15 = vsyncpa [#allocation5], 0
    loop: start=0, step=1, limit=6
    $region2: #{tpu_custom_call.1} parent=1 // loop_pre_header
      _
    $region3: #{tpu_custom_call.1} parent=1 // loop_header
      %s17 = sphi 0, %s21
      %p18 = scmp.ge.s32.totalorder %s17, 6
      %s24 = sphi 0, %s36
      %s25 = sphi 0, %s32
      %s26 = sphi 0, %s24
      %s27 = sphi 0, %s25
      %s28 = sphi 0, %s26
      %s29 = sphi 0, %s27
      %s39 = sphi 0, %s41
      %s42 = sphi 0, %s39
      %s43 = sphi 0, %s42
      %s59 = sphi 0, %s43
      %s65 = sphi 0, %s67
      %s68 = sphi 0, %s65
      %s69 = sphi 0, %s68
      %s85 = sphi 0, %s69
      %s91 = sphi 0, %s93
      %s94 = sphi 0, %s91
      %s95 = sphi 0, %s94
      %s111 = sphi 0, %s95
      %s115 = sphi 0, %s115
      %s117 = sphi 0, %s115
      %s118 = sphi 0, %s117
      %s132 = sphi 0, %s118
      %s136 = sphi 0, %s136
      %s138 = sphi 0, %s136
      %s139 = sphi 0, %s138
      %s153 = sphi 0, %s139
      %s157 = sphi 0, %s157
      %s159 = sphi 0, %s157
      %s160 = sphi 0, %s159
      %s174 = sphi 0, %s160
      %s180 = sphi 0, %s182
      %s183 = sphi 0, %s180
      %s184 = sphi 0, %s183
      %s200 = sphi 0, %s184
    $region4: #{tpu_custom_call.1} parent=1 // loop_header_branch
      %20 = sbr.rel (%p18) target = $region8
    $region5: #{tpu_custom_call.1} parent=1 // loop_body
      %s22 = ssub.s32 %s17, 1
      %s23 = ssub.s32 %s17, 2
      %s30 = sadd.s32 1, %s25
      %p31 = scmp.ge.s32.totalorder %s30, 4
      %s32 = scalar_select %p31, 0, %s30
      %s33 = sadd.s32 1, %s24
      %s34 = scalar_select %p31, %s33, %s24
      %p35 = scmp.ge.s32.totalorder %s34, 1
      %s36 = scalar_select %p35, 0, %s34
      %s37 = ssub.s32 %s24, %s36
      %p38 = scmp.eq.s32.totalorder %s37, 0
      %s40 = sadd.s32 %s39, 1
      %s41 = scalar_select %p38, %s39, %s40
      %p44 = pneg %p38
      %p45 = scmp.eq.s32.totalorder %s17, 3
      %p46 = por %p44, %p45
      %p47 = scmp.ne.s32.totalorder %s39, %s42
      %p48 = scmp.eq.s32.totalorder %s17, 0
      %p49 = por %p47, %p48
      %p50 = scmp.ne.s32.totalorder %s39, %s42
      %p51 = scmp.eq.s32.totalorder %s22, 3
      %p52 = por %p50, %p51
      %p53 = scmp.ne.s32.totalorder %s42, %s43
      %p54 = scmp.eq.s32.totalorder %s22, 0
      %p55 = por %p53, %p54
      %p56 = scmp.ne.s32.totalorder %s42, %s43
      %p57 = scmp.eq.s32.totalorder %s23, 3
      %p58 = por %p56, %p57
      %p60 = scmp.ne.s32.totalorder %s43, %s59
      %p61 = scmp.eq.s32.totalorder %s23, 0
      %p62 = por %p60, %p61
      %s63 = ssub.s32 %s24, %s36
      %p64 = scmp.eq.s32.totalorder %s63, 0
      %s66 = sadd.s32 %s65, 1
      %s67 = scalar_select %p64, %s65, %s66
      %p70 = pneg %p64
      %p71 = scmp.eq.s32.totalorder %s17, 3
      %p72 = por %p70, %p71
      %p73 = scmp.ne.s32.totalorder %s65, %s68
      %p74 = scmp.eq.s32.totalorder %s17, 0
      %p75 = por %p73, %p74
      %p76 = scmp.ne.s32.totalorder %s65, %s68
      %p77 = scmp.eq.s32.totalorder %s22, 3
      %p78 = por %p76, %p77
      %p79 = scmp.ne.s32.totalorder %s68, %s69
      %p80 = scmp.eq.s32.totalorder %s22, 0
      %p81 = por %p79, %p80
      %p82 = scmp.ne.s32.totalorder %s68, %s69
      %p83 = scmp.eq.s32.totalorder %s23, 3
      %p84 = por %p82, %p83
      %p86 = scmp.ne.s32.totalorder %s69, %s85
      %p87 = scmp.eq.s32.totalorder %s23, 0
      %p88 = por %p86, %p87
      %s89 = ssub.s32 %s25, %s32
      %p90 = scmp.eq.s32.totalorder %s89, 0
      %s92 = sadd.s32 %s91, 1
      %s93 = scalar_select %p90, %s91, %s92
      %p96 = pneg %p90
      %p97 = scmp.eq.s32.totalorder %s17, 3
      %p98 = por %p96, %p97
      %p99 = scmp.ne.s32.totalorder %s91, %s94
      %p100 = scmp.eq.s32.totalorder %s17, 0
      %p101 = por %p99, %p100
      %p102 = scmp.ne.s32.totalorder %s91, %s94
      %p103 = scmp.eq.s32.totalorder %s22, 3
      %p104 = por %p102, %p103
      %p105 = scmp.ne.s32.totalorder %s94, %s95
      %p106 = scmp.eq.s32.totalorder %s22, 0
      %p107 = por %p105, %p106
      %p108 = scmp.ne.s32.totalorder %s94, %s95
      %p109 = scmp.eq.s32.totalorder %s23, 3
      %p110 = por %p108, %p109
      %p112 = scmp.ne.s32.totalorder %s95, %s111
      %p113 = scmp.eq.s32.totalorder %s23, 0
      %p114 = por %p112, %p113
      %s116 = sadd.s32 %s115, 1
      %p119 = scmp.eq.s32.totalorder %s17, 3
      %p120 = scmp.ne.s32.totalorder %s115, %s117
      %p121 = scmp.eq.s32.totalorder %s17, 0
      %p122 = por %p120, %p121
      %p123 = scmp.ne.s32.totalorder %s115, %s117
      %p124 = scmp.eq.s32.totalorder %s22, 3
      %p125 = por %p123, %p124
      %p126 = scmp.ne.s32.totalorder %s117, %s118
      %p127 = scmp.eq.s32.totalorder %s22, 0
      %p128 = por %p126, %p127
      %p129 = scmp.ne.s32.totalorder %s117, %s118
      %p130 = scmp.eq.s32.totalorder %s23, 3
      %p131 = por %p129, %p130
      %p133 = scmp.ne.s32.totalorder %s118, %s132
      %p134 = scmp.eq.s32.totalorder %s23, 0
      %p135 = por %p133, %p134
      %s137 = sadd.s32 %s136, 1
      %p140 = scmp.eq.s32.totalorder %s17, 3
      %p141 = scmp.ne.s32.totalorder %s136, %s138
      %p142 = scmp.eq.s32.totalorder %s17, 0
      %p143 = por %p141, %p142
      %p144 = scmp.ne.s32.totalorder %s136, %s138
      %p145 = scmp.eq.s32.totalorder %s22, 3
      %p146 = por %p144, %p145
      %p147 = scmp.ne.s32.totalorder %s138, %s139
      %p148 = scmp.eq.s32.totalorder %s22, 0
      %p149 = por %p147, %p148
      %p150 = scmp.ne.s32.totalorder %s138, %s139
      %p151 = scmp.eq.s32.totalorder %s23, 3
      %p152 = por %p150, %p151
      %p154 = scmp.ne.s32.totalorder %s139, %s153
      %p155 = scmp.eq.s32.totalorder %s23, 0
      %p156 = por %p154, %p155
      %s158 = sadd.s32 %s157, 1
      %p161 = scmp.eq.s32.totalorder %s17, 3
      %p162 = scmp.ne.s32.totalorder %s157, %s159
      %p163 = scmp.eq.s32.totalorder %s17, 0
      %p164 = por %p162, %p163
      %p165 = scmp.ne.s32.totalorder %s157, %s159
      %p166 = scmp.eq.s32.totalorder %s22, 3
      %p167 = por %p165, %p166
      %p168 = scmp.ne.s32.totalorder %s159, %s160
      %p169 = scmp.eq.s32.totalorder %s22, 0
      %p170 = por %p168, %p169
      %p171 = scmp.ne.s32.totalorder %s159, %s160
      %p172 = scmp.eq.s32.totalorder %s23, 3
      %p173 = por %p171, %p172
      %p175 = scmp.ne.s32.totalorder %s160, %s174
      %p176 = scmp.eq.s32.totalorder %s23, 0
      %p177 = por %p175, %p176
      %s178 = ssub.s32 %s24, %s36
      %p179 = scmp.eq.s32.totalorder %s178, 0
      %s181 = sadd.s32 %s180, 1
      %s182 = scalar_select %p179, %s180, %s181
      %p185 = pneg %p179
      %p186 = scmp.eq.s32.totalorder %s17, 3
      %p187 = por %p185, %p186
      %p188 = scmp.ne.s32.totalorder %s180, %s183
      %p189 = scmp.eq.s32.totalorder %s17, 0
      %p190 = por %p188, %p189
      %p191 = scmp.ne.s32.totalorder %s180, %s183
      %p192 = scmp.eq.s32.totalorder %s22, 3
      %p193 = por %p191, %p192
      %p194 = scmp.ne.s32.totalorder %s183, %s184
      %p195 = scmp.eq.s32.totalorder %s22, 0
      %p196 = por %p194, %p195
      %p197 = scmp.ne.s32.totalorder %s183, %s184
      %p198 = scmp.eq.s32.totalorder %s23, 3
      %p199 = por %p197, %p198
      %p201 = scmp.ne.s32.totalorder %s184, %s200
      %p202 = scmp.eq.s32.totalorder %s23, 0
      %p203 = por %p201, %p202
      %p204 = scmp.le.s32.totalorder 1, %s17
      %p205 = scmp.lt.s32.totalorder %s17, 5
      %p206 = pnand %p204, %p205
      %p207 = pneg %p206
      // Predicated region
      $region9: #{tpu_custom_call.1} parent=5 // pred_check
        _
      $region10: #{tpu_custom_call.1} parent=5 // pred_check_branch
        %209 = sbr.rel (%p206) target = $region12
      $region11: #{tpu_custom_call.1} parent=5 // pred_region
        %s210 = ssub.s32 %s17, 1
        // Predicated region
        $region13: #{tpu_custom_call.1} parent=11 // pred_check
          %p211 = pneg %p55
        $region14: #{tpu_custom_call.1} parent=11 // pred_check_branch
          %213 = sbr.rel (%p211) target = $region16
        $region15: #{tpu_custom_call.1} parent=11 // pred_region
          %p214 = scmp.lt.s32.totalorder %s26, 0
          %s215 = scalar_select %p214, %s26, 0
          %s216 = smul.addr %s215, 4
          %s217 = scalar_lea.vmem %s0, %s216
        $region16: #{tpu_custom_call.1} parent=11 // pred_fallthru
          _
        // Predicated region
        $region17: #{tpu_custom_call.1} parent=11 // pred_check
          %p218 = pneg %p81
        $region18: #{tpu_custom_call.1} parent=11 // pred_check_branch
          %220 = sbr.rel (%p218) target = $region20
        $region19: #{tpu_custom_call.1} parent=11 // pred_region
          %p221 = scmp.lt.s32.totalorder %s26, 0
          %s222 = scalar_select %p221, %s26, 0
          %s223 = smul.addr %s222, 8
          %s224 = scalar_lea.vmem %s1, %s223
        $region20: #{tpu_custom_call.1} parent=11 // pred_fallthru
          _
        // Predicated region
        $region21: #{tpu_custom_call.1} parent=11 // pred_check
          %p225 = pneg %p128
        $region22: #{tpu_custom_call.1} parent=11 // pred_check_branch
          %227 = sbr.rel (%p225) target = $region24
        $region23: #{tpu_custom_call.1} parent=11 // pred_region
          _
        $region24: #{tpu_custom_call.1} parent=11 // pred_fallthru
          _
        // Predicated region
        $region25: #{tpu_custom_call.1} parent=11 // pred_check
          %p228 = pneg %p149
        $region26: #{tpu_custom_call.1} parent=11 // pred_check_branch
          %230 = sbr.rel (%p228) target = $region28
        $region27: #{tpu_custom_call.1} parent=11 // pred_region
          %s232 = ssub.s32 1024, 1024
          %233 = vsyncadd [#allocation7], %s232
          %s234 = sshll.u32 [#allocation6], 4
          %s235 = int_to_ptr.vmem [resolvable:$true] %s234
          %240 = dma.hbm_to_vmem [thread:$0]  %s4, 1024, %s235, [#allocation7], 64, 64, 4
        $region28: #{tpu_custom_call.1} parent=11 // pred_fallthru
          _
        // Predicated region
        $region29: #{tpu_custom_call.1} parent=11 // pred_check
          %p241 = pneg %p170
        $region30: #{tpu_custom_call.1} parent=11 // pred_check_branch
          %243 = sbr.rel (%p241) target = $region32
        $region31: #{tpu_custom_call.1} parent=11 // pred_region
          _
        $region32: #{tpu_custom_call.1} parent=11 // pred_fallthru
          _
      $region12: #{tpu_custom_call.1} parent=5 // pred_fallthru
        _
      %p244 = scmp.lt.s32.totalorder %s17, 4
      // Predicated region
      $region33: #{tpu_custom_call.1} parent=5 // pred_check
        %p245 = pneg %p244
      $region34: #{tpu_custom_call.1} parent=5 // pred_check_branch
        %247 = sbr.rel (%p245) target = $region36
      $region35: #{tpu_custom_call.1} parent=5 // pred_region
        // Predicated region
        $region37: #{tpu_custom_call.1} parent=35 // pred_check
          %p248 = pneg %p101
        $region38: #{tpu_custom_call.1} parent=35 // pred_check_branch
          %250 = sbr.rel (%p248) target = $region40
        $region39: #{tpu_custom_call.1} parent=35 // pred_region
          %s251 = sand.u32 %s91, 1
          %s252 = scalar_lea.sflag [#allocation4], %s251
          %s253 = sand.u32 %s91, 1
          %s254 = smul.addr %s253, 16
          %s255 = scalar_lea.vmem [#allocation3], %s254
          %s257 = ssub.s32 256, 256
          %258 = vsyncadd %s252, %s257
          %s259 = smul.addr %s25, 4
          %s260 = smul.addr %s259, 64
          %s261 = scalar_lea.hbm %s2, %s260
          %s262 = sshll.u32 %s255, 4
          %s263 = int_to_ptr.vmem [resolvable:$true] %s262
          %268 = dma.hbm_to_vmem [thread:$0]  %s261, 256, %s263, %s252, 64, 64, 4
        $region40: #{tpu_custom_call.1} parent=35 // pred_fallthru
          _
      $region36: #{tpu_custom_call.1} parent=5 // pred_fallthru
        _
      %p269 = scmp.le.s32.totalorder 1, %s17
      %p270 = scmp.lt.s32.totalorder %s17, 5
      %p271 = pnand %p269, %p270
      %p272 = pneg %p271
      // Predicated region
      $region41: #{tpu_custom_call.1} parent=5 // pred_check
        _
      $region42: #{tpu_custom_call.1} parent=5 // pred_check_branch
        %274 = sbr.rel (%p271) target = $region44
      $region43: #{tpu_custom_call.1} parent=5 // pred_region
        %s275 = ssub.s32 %s17, 1
        %s276 = sand.u32 %s94, 1
        %s277 = scalar_lea.sflag [#allocation4], %s276
        %s278 = sand.u32 %s94, 1
        %s279 = smul.addr %s278, 16
        %s280 = scalar_lea.vmem [#allocation3], %s279
        // Predicated region
        $region45: #{tpu_custom_call.1} parent=43 // pred_check
          %p281 = pneg %p107
        $region46: #{tpu_custom_call.1} parent=43 // pred_check_branch
          %283 = sbr.rel (%p281) target = $region48
        $region47: #{tpu_custom_call.1} parent=43 // pred_region
          %284 = dma.done %s277, 256
        $region48: #{tpu_custom_call.1} parent=43 // pred_fallthru
          _
        // Predicated region
        $region49: #{tpu_custom_call.1} parent=43 // pred_check
          %p285 = pneg %p149
        $region50: #{tpu_custom_call.1} parent=43 // pred_check_branch
          %287 = sbr.rel (%p285) target = $region52
        $region51: #{tpu_custom_call.1} parent=43 // pred_region
          %288 = dma.done [#allocation7], 1024
        $region52: #{tpu_custom_call.1} parent=43 // pred_fallthru
          _
        %p289 = scmp.lt.s32.totalorder %s26, 0
        %s290 = scalar_select %p289, %s26, 0
        %s291 = smul.addr %s290, 4
        %s292 = scalar_lea.vmem %s0, %s291
        %p293 = pneg %p55
        %p294 = pneg %p52
        %p295 = scmp.lt.s32.totalorder %s26, 0
        %s296 = scalar_select %p295, %s26, 0
        %s297 = smul.addr %s296, 8
        %s298 = scalar_lea.vmem %s1, %s297
        %p299 = pneg %p81
        %p300 = pneg %p78
        %s301 = sand.u32 %s94, 1
        %s302 = scalar_lea.sflag [#allocation4], %s301
        %s303 = sand.u32 %s94, 1
        %s304 = smul.addr %s303, 16
        %s305 = scalar_lea.vmem [#allocation3], %s304
        %p306 = pneg %p107
        %p307 = pneg %p104
        %p308 = pneg %p128
        %p309 = pneg %p125
        %p310 = pneg %p149
        %p311 = pneg %p146
        %p312 = pneg %p170
        %p313 = pneg %p167
        %p314 = pneg %p196
        %p315 = pneg %p193
        %p316 = scmp.lt.s32.totalorder %s26, 0
        %s317 = scalar_select %p316, %s26, 0
        %s318 = smul.addr %s317, 4
        %s319 = scalar_lea.vmem %s0, %s318
        %p320 = scmp.lt.s32.totalorder %s26, 0
        %s321 = scalar_select %p320, %s26, 0
        %s322 = smul.addr %s321, 8
        %s323 = scalar_lea.vmem %s1, %s322
        %p325 = scmp.eq.s32.totalorder %s27, 0
        // Predicated region
        $region53: #{tpu_custom_call.1} parent=43 // pred_check
          %p326 = pneg %p325
        $region54: #{tpu_custom_call.1} parent=43 // pred_check_branch
          %328 = sbr.rel (%p326) target = $region56
        $region55: #{tpu_custom_call.1} parent=43 // pred_region
          %vm329 = vcmask 261120
          %330 = vst.msk [vmem:[#allocation2] sm:$0xff] %vm329, 0.0
        $region56: #{tpu_custom_call.1} parent=43 // pred_fallthru
          _
        %v331 = vld [vmem:[%s323] sm:$0xff]
        %v332 = vlaneseq
        %v333 = vand.u32 %v332, 127
        %v334 = vstv %s27
        %vm335 = vcmp.eq.s32.totalorder %v333, %v334
        %v336 = vsel %vm335, %v331, 0.0
        %vm337 = vcmask 31744
        %v338 = vsel %vm337, %v336, 0.0
        %339 = vadd.xlane.f32.xlu0 %v338
        %v340 = vpop.xlane.xlu0 %339
        %v341 = vld [vmem:[%s319] sm:$0xf]
        %v342 = vld [vmem:[%s280] sm:$0xf]
        %v343 = vld [vmem:[%s280 + $0x4] sm:$0xf]
        %v344 = vld [vmem:[%s280 + $0x8] sm:$0xf]
        %v345 = vld [vmem:[%s280 + $0xc] sm:$0xf]
        %v350 = vunpack.c.l.b16 %v342
        %v351 = vunpack.c.l.b16 %v343
        %v352 = vunpack.c.l.b16 %v344
        %v353 = vunpack.c.l.b16 %v345
        %v354 = vpack.c.b16 %v351, %v350
        %v355 = vpack.c.b16 %v353, %v352
        %vm358 = vcmask 261120
        %v360 = vsel %vm358, %v341, 0
        %362 = vmatprep.subr.bf16.mxu0 0
        %363 = vmatpush1.bf16.msra.mxu0 %v354
        %364 = vmatprep.subr.bf16.mxu0 0
        %365 = vmatpush1.bf16.msra.mxu0 %v355
        %366 = vmatprep.subr.bf16.mxu0 0
        %367 = vmatpush1.bf16.msra.mxu0 0
        %368 = vmatprep.subr.bf16.mxu0 0
        %369 = vmatpush1.bf16.msra.mxu0 0
        %370 = vmatprep.subr.bf16.mxu0 0
        %371 = vmatpush1.bf16.msra.mxu0 0
        %372 = vmatprep.subr.bf16.mxu0 0
        %373 = vmatpush1.bf16.msra.mxu0 0
        %374 = vmatprep.subr.bf16.mxu0 0
        %375 = vmatpush1.bf16.msra.mxu0 0
        %376 = vmatprep.subr.bf16.mxu0 0
        %377 = vmatpush1.bf16.msra.mxu0 0
        %378 = vmatprep.subr.bf16.mxu0 0
        %379 = vmatpush1.bf16.msra.mxu0 0
        %380 = vmatprep.subr.bf16.mxu0 0
        %381 = vmatpush1.bf16.msra.mxu0 0
        %382 = vmatprep.subr.bf16.mxu0 0
        %383 = vmatpush1.bf16.msra.mxu0 0
        %384 = vmatprep.subr.bf16.mxu0 0
        %385 = vmatpush1.bf16.msra.mxu0 0
        %386 = vmatprep.subr.bf16.mxu0 0
        %387 = vmatpush1.bf16.msra.mxu0 0
        %388 = vmatprep.subr.bf16.mxu0 0
        %389 = vmatpush1.bf16.msra.mxu0 0
        %390 = vmatprep.subr.bf16.mxu0 0
        %391 = vmatpush1.bf16.msra.mxu0 0
        %392 = vmatprep.subr.bf16.mxu0 0
        %393 = vmatpush1.bf16.msra.mxu0 0
        %394 = vmatprep.mubr.bf16.mxu0 0
        %395 = vmatmul.mubr.bf16.gmra.mrb[0].mxu0 %v360
        %v396 = vpop.f32.mrb[0].mxu0
        %v397 = vadd.f32 0.0, %v396
        %v398 = vpop.f32.mrb[0].mxu0
        %v399 = vpop.f32.mrb[0].mxu0
        %v400 = vpop.f32.mrb[0].mxu0
        %401 = vdwg.mxu0
        %v402 = vld [vmem:[#allocation2] sm:$0xff]
        %v403 = vmul.f32 %v340, %v397
        %v404 = vadd.f32 %v402, %v403
        %405 = vst.msk [vmem:[#allocation2] sm:$0xff] %vm358, %v404
        %p406 = scmp.eq.s32.totalorder %s27, 3
        // Predicated region
        $region57: #{tpu_custom_call.1} parent=43 // pred_check
          %p407 = pneg %p406
        $region58: #{tpu_custom_call.1} parent=43 // pred_check_branch
          %409 = sbr.rel (%p407) target = $region60
        $region59: #{tpu_custom_call.1} parent=43 // pred_region
          %v410 = vld [vmem:[#allocation2] sm:$0xff]
          %v411 = vld [vmem:[%s3] sm:$0xf]
          %v413 = vsel %vm337, %v331, 0
          %vm415 = vcmask 1043456
          %v417 = vsel %vm415, %v411, 0
          %419 = vmatprep.subr.mxu0 0.0
          %420 = vmatpush1.msra.mxu0 %v417
          %421 = vmatprep.subr.mxu0 0.0
          %422 = vmatpush1.msra.mxu0 0.0
          %423 = vmatprep.subr.mxu0 0.0
          %424 = vmatpush1.msra.mxu0 0.0
          %425 = vmatprep.subr.mxu0 0.0
          %426 = vmatpush1.msra.mxu0 0.0
          %427 = vmatprep.subr.mxu0 0.0
          %428 = vmatpush1.msra.mxu0 0.0
          %429 = vmatprep.subr.mxu0 0.0
          %430 = vmatpush1.msra.mxu0 0.0
          %431 = vmatprep.subr.mxu0 0.0
          %432 = vmatpush1.msra.mxu0 0.0
          %433 = vmatprep.subr.mxu0 0.0
          %434 = vmatpush1.msra.mxu0 0.0
          %435 = vmatprep.subr.mxu0 0.0
          %436 = vmatpush1.msra.mxu0 0.0
          %437 = vmatprep.subr.mxu0 0.0
          %438 = vmatpush1.msra.mxu0 0.0
          %439 = vmatprep.subr.mxu0 0.0
          %440 = vmatpush1.msra.mxu0 0.0
          %441 = vmatprep.subr.mxu0 0.0
          %442 = vmatpush1.msra.mxu0 0.0
          %443 = vmatprep.subr.mxu0 0.0
          %444 = vmatpush1.msra.mxu0 0.0
          %445 = vmatprep.subr.mxu0 0.0
          %446 = vmatpush1.msra.mxu0 0.0
          %447 = vmatprep.subr.mxu0 0.0
          %448 = vmatpush1.msra.mxu0 0.0
          %449 = vmatprep.subr.mxu0 0.0
          %450 = vmatpush1.msra.mxu0 0.0
          %451 = vmatprep.subr.mxu0 0.0
          %452 = vmatpush1.msra.mxu0 0.0
          %453 = vmatprep.subr.mxu0 0.0
          %454 = vmatpush1.msra.mxu0 0.0
          %455 = vmatprep.subr.mxu0 0.0
          %456 = vmatpush1.msra.mxu0 0.0
          %457 = vmatprep.subr.mxu0 0.0
          %458 = vmatpush1.msra.mxu0 0.0
          %459 = vmatprep.subr.mxu0 0.0
          %460 = vmatpush1.msra.mxu0 0.0
          %461 = vmatprep.subr.mxu0 0.0
          %462 = vmatpush1.msra.mxu0 0.0
          %463 = vmatprep.subr.mxu0 0.0
          %464 = vmatpush1.msra.mxu0 0.0
          %465 = vmatprep.subr.mxu0 0.0
          %466 = vmatpush1.msra.mxu0 0.0
          %467 = vmatprep.subr.mxu0 0.0
          %468 = vmatpush1.msra.mxu0 0.0
          %469 = vmatprep.subr.mxu0 0.0
          %470 = vmatpush1.msra.mxu0 0.0
          %471 = vmatprep.subr.mxu0 0.0
          %472 = vmatpush1.msra.mxu0 0.0
          %473 = vmatprep.subr.mxu0 0.0
          %474 = vmatpush1.msra.mxu0 0.0
          %475 = vmatprep.subr.mxu0 0.0
          %476 = vmatpush1.msra.mxu0 0.0
          %477 = vmatprep.subr.mxu0 0.0
          %478 = vmatpush1.msra.mxu0 0.0
          %479 = vmatprep.subr.mxu0 0.0
          %480 = vmatpush1.msra.mxu0 0.0
          %481 = vmatprep.subr.mxu0 0.0
          %482 = vmatpush1.msra.mxu0 0.0
          %483 = vmatprep.mubr.f32.mxu0 0.0
          %484 = vmatmul.mubr.f32.gmra.mrb[0].mxu0 %v413
          %v485 = vpop.f32.mrb[0].mxu0
          %v486 = vadd.f32 0.0, %v485
          %v487 = vpop.f32.mrb[0].mxu0
          %488 = vdwg.mxu0
          %v489 = vadd.f32 %v410, %v486
          %v490 = vtanh.pop %v489
          %v491 = vpack.c.bf16 %v490, %v490
          %v492 = vld [vmem:[%s5] sm:$0xf]
          %v493 = vld [vmem:[#allocation6] sm:$0xf]
          %v494 = vld [vmem:[#allocation6 + $0x4] sm:$0xf]
          %v495 = vld [vmem:[#allocation6 + $0x8] sm:$0xf]
          %v496 = vld [vmem:[#allocation6 + $0xc] sm:$0xf]
          %v501 = vunpack.c.l.b16 %v493
          %v502 = vunpack.c.l.b16 %v494
          %v503 = vunpack.c.l.b16 %v495
          %v504 = vunpack.c.l.b16 %v496
          %v505 = vpack.c.b16 %v502, %v501
          %v506 = vpack.c.b16 %v504, %v503
          %v510 = vsel %vm358, %v491, 0
          %512 = vmatprep.subr.bf16.mxu0 0
          %513 = vmatpush1.bf16.msra.mxu0 %v505
          %514 = vmatprep.subr.bf16.mxu0 0
          %515 = vmatpush1.bf16.msra.mxu0 %v506
          %516 = vmatprep.subr.bf16.mxu0 0
          %517 = vmatpush1.bf16.msra.mxu0 0
          %518 = vmatprep.subr.bf16.mxu0 0
          %519 = vmatpush1.bf16.msra.mxu0 0
          %520 = vmatprep.subr.bf16.mxu0 0
          %521 = vmatpush1.bf16.msra.mxu0 0
          %522 = vmatprep.subr.bf16.mxu0 0
          %523 = vmatpush1.bf16.msra.mxu0 0
          %524 = vmatprep.subr.bf16.mxu0 0
          %525 = vmatpush1.bf16.msra.mxu0 0
          %526 = vmatprep.subr.bf16.mxu0 0
          %527 = vmatpush1.bf16.msra.mxu0 0
          %528 = vmatprep.subr.bf16.mxu0 0
          %529 = vmatpush1.bf16.msra.mxu0 0
          %530 = vmatprep.subr.bf16.mxu0 0
          %531 = vmatpush1.bf16.msra.mxu0 0
          %532 = vmatprep.subr.bf16.mxu0 0
          %533 = vmatpush1.bf16.msra.mxu0 0
          %534 = vmatprep.subr.bf16.mxu0 0
          %535 = vmatpush1.bf16.msra.mxu0 0
          %536 = vmatprep.subr.bf16.mxu0 0
          %537 = vmatpush1.bf16.msra.mxu0 0
          %538 = vmatprep.subr.bf16.mxu0 0
          %539 = vmatpush1.bf16.msra.mxu0 0
          %540 = vmatprep.subr.bf16.mxu0 0
          %541 = vmatpush1.bf16.msra.mxu0 0
          %542 = vmatprep.subr.bf16.mxu0 0
          %543 = vmatpush1.bf16.msra.mxu0 0
          %544 = vmatprep.mubr.bf16.mxu0 0
          %545 = vmatmul.mubr.bf16.gmra.mrb[0].mxu0 %v510
          %v546 = vpop.f32.mrb[0].mxu0
          %v547 = vadd.f32 0.0, %v546
          %v548 = vpop.f32.mrb[0].mxu0
          %v549 = vpop.f32.mrb[0].mxu0
          %v550 = vpop.f32.mrb[0].mxu0
          %551 = vdwg.mxu0
          %552 = vset.pattern.permute.xlu0 0
          %553 = vperm.xlu0 %552, %v331
          %v554 = vpop.permute.xlu0 %553
          %v556 = vmul.f32 %v554, %v547
          %v558 = vsel %vm415, %v492, 0
          %560 = vmatprep.subr.mxu0 0.0
          %561 = vmatpush1.msra.mxu0 %v558
          %562 = vmatprep.subr.mxu0 0.0
          %563 = vmatpush1.msra.mxu0 0.0
          %564 = vmatprep.subr.mxu0 0.0
          %565 = vmatpush1.msra.mxu0 0.0
          %566 = vmatprep.subr.mxu0 0.0
          %567 = vmatpush1.msra.mxu0 0.0
          %568 = vmatprep.subr.mxu0 0.0
          %569 = vmatpush1.msra.mxu0 0.0
          %570 = vmatprep.subr.mxu0 0.0
          %571 = vmatpush1.msra.mxu0 0.0
          %572 = vmatprep.subr.mxu0 0.0
          %573 = vmatpush1.msra.mxu0 0.0
          %574 = vmatprep.subr.mxu0 0.0
          %575 = vmatpush1.msra.mxu0 0.0
          %576 = vmatprep.subr.mxu0 0.0
          %577 = vmatpush1.msra.mxu0 0.0
          %578 = vmatprep.subr.mxu0 0.0
          %579 = vmatpush1.msra.mxu0 0.0
          %580 = vmatprep.subr.mxu0 0.0
          %581 = vmatpush1.msra.mxu0 0.0
          %582 = vmatprep.subr.mxu0 0.0
          %583 = vmatpush1.msra.mxu0 0.0
          %584 = vmatprep.subr.mxu0 0.0
          %585 = vmatpush1.msra.mxu0 0.0
          %586 = vmatprep.subr.mxu0 0.0
          %587 = vmatpush1.msra.mxu0 0.0
          %588 = vmatprep.subr.mxu0 0.0
          %589 = vmatpush1.msra.mxu0 0.0
          %590 = vmatprep.subr.mxu0 0.0
          %591 = vmatpush1.msra.mxu0 0.0
          %592 = vmatprep.subr.mxu0 0.0
          %593 = vmatpush1.msra.mxu0 0.0
          %594 = vmatprep.subr.mxu0 0.0
          %595 = vmatpush1.msra.mxu0 0.0
          %596 = vmatprep.subr.mxu0 0.0
          %597 = vmatpush1.msra.mxu0 0.0
          %598 = vmatprep.subr.mxu0 0.0
          %599 = vmatpush1.msra.mxu0 0.0
          %600 = vmatprep.subr.mxu0 0.0
          %601 = vmatpush1.msra.mxu0 0.0
          %602 = vmatprep.subr.mxu0 0.0
          %603 = vmatpush1.msra.mxu0 0.0
          %604 = vmatprep.subr.mxu0 0.0
          %605 = vmatpush1.msra.mxu0 0.0
          %606 = vmatprep.subr.mxu0 0.0
          %607 = vmatpush1.msra.mxu0 0.0
          %608 = vmatprep.subr.mxu0 0.0
          %609 = vmatpush1.msra.mxu0 0.0
          %610 = vmatprep.subr.mxu0 0.0
          %611 = vmatpush1.msra.mxu0 0.0
          %612 = vmatprep.subr.mxu0 0.0
          %613 = vmatpush1.msra.mxu0 0.0
          %614 = vmatprep.subr.mxu0 0.0
          %615 = vmatpush1.msra.mxu0 0.0
          %616 = vmatprep.subr.mxu0 0.0
          %617 = vmatpush1.msra.mxu0 0.0
          %618 = vmatprep.subr.mxu0 0.0
          %619 = vmatpush1.msra.mxu0 0.0
          %620 = vmatprep.subr.mxu0 0.0
          %621 = vmatpush1.msra.mxu0 0.0
          %622 = vmatprep.subr.mxu0 0.0
          %623 = vmatpush1.msra.mxu0 0.0
          %624 = vmatprep.mubr.f32.mxu0 0.0
          %625 = vmatmul.mubr.f32.gmra.mrb[0].mxu0 %v413
          %v626 = vpop.f32.mrb[0].mxu0
          %v627 = vadd.f32 %v556, %v626
          %v628 = vpop.f32.mrb[0].mxu0
          %629 = vdwg.mxu0
          %s630 = scalar_lea.vmem [#allocation6], 16
          %v631 = vld [vmem:[%s630] sm:$0xf]
          %v632 = vld [vmem:[%s630 + $0x4] sm:$0xf]
          %v633 = vld [vmem:[%s630 + $0x8] sm:$0xf]
          %v634 = vld [vmem:[%s630 + $0xc] sm:$0xf]
          %v639 = vunpack.c.l.b16 %v631
          %v640 = vunpack.c.l.b16 %v632
          %v641 = vunpack.c.l.b16 %v633
          %v642 = vunpack.c.l.b16 %v634
          %v643 = vpack.c.b16 %v640, %v639
          %v644 = vpack.c.b16 %v642, %v641
          %647 = vmatprep.subr.bf16.mxu0 0
          %648 = vmatpush1.bf16.msra.mxu0 %v643
          %649 = vmatprep.subr.bf16.mxu0 0
          %650 = vmatpush1.bf16.msra.mxu0 %v644
          %651 = vmatprep.subr.bf16.mxu0 0
          %652 = vmatpush1.bf16.msra.mxu0 0
          %653 = vmatprep.subr.bf16.mxu0 0
          %654 = vmatpush1.bf16.msra.mxu0 0
          %655 = vmatprep.subr.bf16.mxu0 0
          %656 = vmatpush1.bf16.msra.mxu0 0
          %657 = vmatprep.subr.bf16.mxu0 0
          %658 = vmatpush1.bf16.msra.mxu0 0
          %659 = vmatprep.subr.bf16.mxu0 0
          %660 = vmatpush1.bf16.msra.mxu0 0
          %661 = vmatprep.subr.bf16.mxu0 0
          %662 = vmatpush1.bf16.msra.mxu0 0
          %663 = vmatprep.subr.bf16.mxu0 0
          %664 = vmatpush1.bf16.msra.mxu0 0
          %665 = vmatprep.subr.bf16.mxu0 0
          %666 = vmatpush1.bf16.msra.mxu0 0
          %667 = vmatprep.subr.bf16.mxu0 0
          %668 = vmatpush1.bf16.msra.mxu0 0
          %669 = vmatprep.subr.bf16.mxu0 0
          %670 = vmatpush1.bf16.msra.mxu0 0
          %671 = vmatprep.subr.bf16.mxu0 0
          %672 = vmatpush1.bf16.msra.mxu0 0
          %673 = vmatprep.subr.bf16.mxu0 0
          %674 = vmatpush1.bf16.msra.mxu0 0
          %675 = vmatprep.subr.bf16.mxu0 0
          %676 = vmatpush1.bf16.msra.mxu0 0
          %677 = vmatprep.subr.bf16.mxu0 0
          %678 = vmatpush1.bf16.msra.mxu0 0
          %679 = vmatprep.mubr.bf16.mxu0 0
          %680 = vmatmul.mubr.bf16.gmra.mrb[0].mxu0 %v510
          %v681 = vpop.f32.mrb[0].mxu0
          %v682 = vadd.f32 0.0, %v681
          %v683 = vpop.f32.mrb[0].mxu0
          %v684 = vpop.f32.mrb[0].mxu0
          %v685 = vpop.f32.mrb[0].mxu0
          %686 = vdwg.mxu0
          %687 = vset.pattern.permute.xlu0 1
          %688 = vperm.xlu0 %687, %v331
          %v689 = vpop.permute.xlu0 %688
          %v691 = vmul.f32 %v689, %v682
          %v692 = vadd.f32 %v627, %v691
          %s693 = scalar_lea.vmem [#allocation6], 32
          %v694 = vld [vmem:[%s693] sm:$0xf]
          %v695 = vld [vmem:[%s693 + $0x4] sm:$0xf]
          %v696 = vld [vmem:[%s693 + $0x8] sm:$0xf]
          %v697 = vld [vmem:[%s693 + $0xc] sm:$0xf]
          %v702 = vunpack.c.l.b16 %v694
          %v703 = vunpack.c.l.b16 %v695
          %v704 = vunpack.c.l.b16 %v696
          %v705 = vunpack.c.l.b16 %v697
          %v706 = vpack.c.b16 %v703, %v702
          %v707 = vpack.c.b16 %v705, %v704
          %710 = vmatprep.subr.bf16.mxu0 0
          %711 = vmatpush1.bf16.msra.mxu0 %v706
          %712 = vmatprep.subr.bf16.mxu0 0
          %713 = vmatpush1.bf16.msra.mxu0 %v707
          %714 = vmatprep.subr.bf16.mxu0 0
          %715 = vmatpush1.bf16.msra.mxu0 0
          %716 = vmatprep.subr.bf16.mxu0 0
          %717 = vmatpush1.bf16.msra.mxu0 0
          %718 = vmatprep.subr.bf16.mxu0 0
          %719 = vmatpush1.bf16.msra.mxu0 0
          %720 = vmatprep.subr.bf16.mxu0 0
          %721 = vmatpush1.bf16.msra.mxu0 0
          %722 = vmatprep.subr.bf16.mxu0 0
          %723 = vmatpush1.bf16.msra.mxu0 0
          %724 = vmatprep.subr.bf16.mxu0 0
          %725 = vmatpush1.bf16.msra.mxu0 0
          %726 = vmatprep.subr.bf16.mxu0 0
          %727 = vmatpush1.bf16.msra.mxu0 0
          %728 = vmatprep.subr.bf16.mxu0 0
          %729 = vmatpush1.bf16.msra.mxu0 0
          %730 = vmatprep.subr.bf16.mxu0 0
          %731 = vmatpush1.bf16.msra.mxu0 0
          %732 = vmatprep.subr.bf16.mxu0 0
          %733 = vmatpush1.bf16.msra.mxu0 0
          %734 = vmatprep.subr.bf16.mxu0 0
          %735 = vmatpush1.bf16.msra.mxu0 0
          %736 = vmatprep.subr.bf16.mxu0 0
          %737 = vmatpush1.bf16.msra.mxu0 0
          %738 = vmatprep.subr.bf16.mxu0 0
          %739 = vmatpush1.bf16.msra.mxu0 0
          %740 = vmatprep.subr.bf16.mxu0 0
          %741 = vmatpush1.bf16.msra.mxu0 0
          %742 = vmatprep.mubr.bf16.mxu0 0
          %743 = vmatmul.mubr.bf16.gmra.mrb[0].mxu0 %v510
          %v744 = vpop.f32.mrb[0].mxu0
          %v745 = vadd.f32 0.0, %v744
          %v746 = vpop.f32.mrb[0].mxu0
          %v747 = vpop.f32.mrb[0].mxu0
          %v748 = vpop.f32.mrb[0].mxu0
          %749 = vdwg.mxu0
          %750 = vset.pattern.permute.xlu0 2
          %751 = vperm.xlu0 %750, %v331
          %v752 = vpop.permute.xlu0 %751
          %v754 = vmul.f32 %v752, %v745
          %v755 = vadd.f32 %v692, %v754
          %s756 = scalar_lea.vmem [#allocation6], 48
          %v757 = vld [vmem:[%s756] sm:$0xf]
          %v758 = vld [vmem:[%s756 + $0x4] sm:$0xf]
          %v759 = vld [vmem:[%s756 + $0x8] sm:$0xf]
          %v760 = vld [vmem:[%s756 + $0xc] sm:$0xf]
          %v765 = vunpack.c.l.b16 %v757
          %v766 = vunpack.c.l.b16 %v758
          %v767 = vunpack.c.l.b16 %v759
          %v768 = vunpack.c.l.b16 %v760
          %v769 = vpack.c.b16 %v766, %v765
          %v770 = vpack.c.b16 %v768, %v767
          %773 = vmatprep.subr.bf16.mxu0 0
          %774 = vmatpush1.bf16.msra.mxu0 %v769
          %775 = vmatprep.subr.bf16.mxu0 0
          %776 = vmatpush1.bf16.msra.mxu0 %v770
          %777 = vmatprep.subr.bf16.mxu0 0
          %778 = vmatpush1.bf16.msra.mxu0 0
          %779 = vmatprep.subr.bf16.mxu0 0
          %780 = vmatpush1.bf16.msra.mxu0 0
          %781 = vmatprep.subr.bf16.mxu0 0
          %782 = vmatpush1.bf16.msra.mxu0 0
          %783 = vmatprep.subr.bf16.mxu0 0
          %784 = vmatpush1.bf16.msra.mxu0 0
          %785 = vmatprep.subr.bf16.mxu0 0
          %786 = vmatpush1.bf16.msra.mxu0 0
          %787 = vmatprep.subr.bf16.mxu0 0
          %788 = vmatpush1.bf16.msra.mxu0 0
          %789 = vmatprep.subr.bf16.mxu0 0
          %790 = vmatpush1.bf16.msra.mxu0 0
          %791 = vmatprep.subr.bf16.mxu0 0
          %792 = vmatpush1.bf16.msra.mxu0 0
          %793 = vmatprep.subr.bf16.mxu0 0
          %794 = vmatpush1.bf16.msra.mxu0 0
          %795 = vmatprep.subr.bf16.mxu0 0
          %796 = vmatpush1.bf16.msra.mxu0 0
          %797 = vmatprep.subr.bf16.mxu0 0
          %798 = vmatpush1.bf16.msra.mxu0 0
          %799 = vmatprep.subr.bf16.mxu0 0
          %800 = vmatpush1.bf16.msra.mxu0 0
          %801 = vmatprep.subr.bf16.mxu0 0
          %802 = vmatpush1.bf16.msra.mxu0 0
          %803 = vmatprep.subr.bf16.mxu0 0
          %804 = vmatpush1.bf16.msra.mxu0 0
          %805 = vmatprep.mubr.bf16.mxu0 0
          %806 = vmatmul.mubr.bf16.gmra.mrb[0].mxu0 %v510
          %v807 = vpop.f32.mrb[0].mxu0
          %v808 = vadd.f32 0.0, %v807
          %v809 = vpop.f32.mrb[0].mxu0
          %v810 = vpop.f32.mrb[0].mxu0
          %v811 = vpop.f32.mrb[0].mxu0
          %812 = vdwg.mxu0
          %813 = vset.pattern.permute.xlu0 3
          %814 = vperm.xlu0 %813, %v331
          %v815 = vpop.permute.xlu0 %814
          %v817 = vmul.f32 %v815, %v808
          %v818 = vadd.f32 %v755, %v817
          %819 = vst [vmem:[#allocation8] sm:$0xff] %v818
        $region60: #{tpu_custom_call.1} parent=43 // pred_fallthru
          _
        // Predicated region
        $region61: #{tpu_custom_call.1} parent=43 // pred_check
          %p820 = pneg %p193
        $region62: #{tpu_custom_call.1} parent=43 // pred_check_branch
          %822 = sbr.rel (%p820) target = $region64
        $region63: #{tpu_custom_call.1} parent=43 // pred_region
          %s824 = ssub.s32 128, 128
          %825 = vsyncadd [#allocation5], %s824
          %s826 = smul.addr %s26, 128
          %s827 = scalar_lea.hbm %s6, %s826
          %s829 = sshll.u32 [#allocation8], 4
          %s830 = int_to_ptr.vmem [resolvable:$true] %s829
          %832 = dma.vmem_to_hbm [thread:$0]  %s830, 128, %s827, [#allocation5]
        $region64: #{tpu_custom_call.1} parent=43 // pred_fallthru
          _
        // Predicated region
        $region65: #{tpu_custom_call.1} parent=43 // pred_check
          %p833 = pneg %p193
        $region66: #{tpu_custom_call.1} parent=43 // pred_check_branch
          %835 = sbr.rel (%p833) target = $region68
        $region67: #{tpu_custom_call.1} parent=43 // pred_region
          %836 = dma.done [#allocation5], 128
        $region68: #{tpu_custom_call.1} parent=43 // pred_fallthru
          _
      $region44: #{tpu_custom_call.1} parent=5 // pred_fallthru
        _
      %p837 = scmp.le.s32.totalorder 2, %s17
      // Predicated region
      $region69: #{tpu_custom_call.1} parent=5 // pred_check
        %p838 = pneg %p837
      $region70: #{tpu_custom_call.1} parent=5 // pred_check_branch
        %840 = sbr.rel (%p838) target = $region72
      $region71: #{tpu_custom_call.1} parent=5 // pred_region
        %s841 = ssub.s32 %s17, 2
      $region72: #{tpu_custom_call.1} parent=5 // pred_fallthru
        _
    $region6: #{tpu_custom_call.1} parent=1 // loop_footer
      %s21 = sadd.s32 1, %s17
    $region7: #{tpu_custom_call.1} parent=1 // loop_footer_branch
      %16 = sbr.rel target = $region3
    $region8: #{tpu_custom_call.1} parent=1 // loop_exit
      _
    %842 = vsyncpa [#allocation4], 1
    %s843 = scalar_lea.sflag [#allocation4], 1
    %844 = vsyncpa %s843, 1
    %845 = vsyncpa [#allocation7], 1
    %846 = vsyncpa [#allocation5], 1
    %s847 = scalar_lea.sflag [#allocation5], 1
    %848 = vsyncpa %s847, 1

</llo_original>
